<compile_context>
chip_gen: v6e
topology: v6e:2x2x1
jax: 0.10.0
libtpu: 0.0.40
codegen_flags: <defaults>
</compile_context>

<pallas_src>
import jax
import jax.numpy as jnp
from jax.experimental import pallas as pl
from jax.experimental.pallas import tpu as pltpu


def _net_kernel(x_ref, w1_ref, b1_ref, w2_ref, b2_ref, o_ref):
    # hidden = relu(x @ W1 + b1)   -- MXU matmul, f32 accumulate
    h = jnp.dot(x_ref[...], w1_ref[...], preferred_element_type=jnp.float32)
    h = jnp.maximum(h + b1_ref[...], 0.0)          # (TB, 64) + (1, 64)
    # out = sigmoid(h . w2 + b2)   -- matvec as VPU mul + cross-lane reduce
    y = jnp.sum(h * w2_ref[...], axis=-1, keepdims=True)   # (TB, 64)*(1, 64) -> (TB, 1)
    y = y + b2_ref[0, 0]                            # scalar bias from SMEM
    o_ref[...] = jax.nn.sigmoid(y)


def net_forward(x, w1, b1, w2, b2, *, max_tile=2048):
    """x: (B, 20) f32, w1: (20, 64), b1: (1, 64), w2: (64, 1), b2: (1, 1) -> (B, 1) f32."""
    B, F = x.shape
    H = w1.shape[1]

    # Tile size: multiple of 8, no larger than needed, capped at max_tile.
    tb = min(max_tile, ((B + 7) // 8) * 8)
    tb = max(8, ((tb + 7) // 8) * 8)
    b_pad = ((B + tb - 1) // tb) * tb
    if b_pad != B:
        x = jnp.pad(x, ((0, b_pad - B), (0, 0)))

    w2_row = w2.reshape(1, H)                       # (1, 64) row for VPU broadcast

    out = pl.pallas_call(
        _net_kernel,
        out_shape=jax.ShapeDtypeStruct((b_pad, 1), jnp.float32),
        grid=(b_pad // tb,),
        in_specs=[
            pl.BlockSpec((tb, F), lambda i: (i, 0)),            # x tile, streamed
            pl.BlockSpec((F, H), lambda i: (0, 0)),             # W1 resident
            pl.BlockSpec((1, H), lambda i: (0, 0)),             # b1 resident
            pl.BlockSpec((1, H), lambda i: (0, 0)),             # w2 as row, resident
            pl.BlockSpec(memory_space=pltpu.SMEM),              # b2 scalar in SMEM
        ],
        out_specs=pl.BlockSpec((tb, 1), lambda i: (i, 0)),
        compiler_params=pltpu.CompilerParams(
            dimension_semantics=("parallel",),                  # v7x: shard batch over both TCs
        ),
    )(x, w1, b1, w2_row, b2)
    return out[:B]


def init_params(key):
    """Deterministic init matching the PyTorch module's __init__ semantics."""
    k1, k2, k3, k4 = jax.random.split(key, 4)
    in1, out1 = 20, 64
    in2, out2 = 64, 1
    # linear1.weight: kaiming_normal_(mode='fan_out') -> std = sqrt(2 / fan_out)
    w1 = jax.random.normal(k1, (in1, out1), jnp.float32) * jnp.sqrt(2.0 / out1)
    # linear1.bias: PyTorch default uniform(-1/sqrt(fan_in), 1/sqrt(fan_in))
    b1 = jax.random.uniform(k2, (1, out1), jnp.float32,
                            -1.0 / jnp.sqrt(in1), 1.0 / jnp.sqrt(in1))
    # linear2: PyTorch default kaiming_uniform for weight, uniform for bias
    bound_w2 = 1.0 / jnp.sqrt(in2)
    w2 = jax.random.uniform(k3, (in2, out2), jnp.float32, -bound_w2, bound_w2)
    b2 = jax.random.uniform(k4, (1, out2), jnp.float32, -bound_w2, bound_w2)
    return w1, b1, w2, b2


def reference_forward(x, w1, b1, w2, b2):
    h = jnp.maximum(x @ w1 + b1, 0.0)
    return jax.nn.sigmoid(h @ w2 + b2)


if __name__ == "__main__":
    key = jax.random.PRNGKey(0)
    kx, kp, kx2 = jax.random.split(key, 3)
    w1, b1, w2, b2 = init_params(kp)

    # Small demo batch (matches the module's toy use).
    batch = 8
    x = jax.random.normal(kx, (batch, 20), jnp.float32)
    out = jax.block_until_ready(net_forward(x, w1, b1, w2, b2))
    ref = reference_forward(x, w1, b1, w2, b2)
    assert out.shape == (batch, 1)
    assert jnp.allclose(out, ref, atol=1e-5, rtol=1e-5)

    # Larger, non-tile-multiple batch exercises the grid + padding path.
    batch2 = 5000
    x2 = jax.random.normal(kx2, (batch2, 20), jnp.float32)
    out2 = jax.block_until_ready(net_forward(x2, w1, b1, w2, b2))
    ref2 = reference_forward(x2, w1, b1, w2, b2)
    assert out2.shape == (batch2, 1)
    assert jnp.allclose(out2, ref2, atol=1e-5, rtol=1e-5)

    print("KERNEL_OK")
</pallas_src>

<mosaic_0001>
module attributes {stable_mosaic.version = 11 : i64} {
  func.func @_net_kernel(%arg0: i32, %arg1: memref<8x20xf32, #tpu.memory_space<vmem>>, %arg2: memref<20x64xf32, #tpu.memory_space<vmem>>, %arg3: memref<1x64xf32, #tpu.memory_space<vmem>>, %arg4: memref<1x64xf32, #tpu.memory_space<vmem>>, %arg5: memref<1x1xf32, #tpu.memory_space<smem>>, %arg6: memref<8x1xf32, #tpu.memory_space<vmem>>) attributes {dimension_semantics = [#tpu.dimension_semantics<parallel>], iteration_bounds = array<i64: 1>, scalar_prefetch = 0 : i64, scratch_operands = 0 : i64, tpu.core_type = #tpu.core_type<tc>, window_params = [{transform_indices = @transform_0, window_bounds = array<i64: 8, 20>}, {pipeline_mode = #tpu.pipeline_mode<synchronous>, transform_indices = @transform_1, window_bounds = array<i64: 20, 64>}, {pipeline_mode = #tpu.pipeline_mode<synchronous>, transform_indices = @transform_2, window_bounds = array<i64: 1, 64>}, {pipeline_mode = #tpu.pipeline_mode<synchronous>, transform_indices = @transform_3, window_bounds = array<i64: 1, 64>}, {transform_indices = @transform_4, window_bounds = array<i64: 1, 1>}, {transform_indices = @transform_5, window_bounds = array<i64: 8, 1>}]} {
    %c0 = arith.constant 0 : index
    %c0_0 = arith.constant 0 : index
    %0 = vector.load %arg1[%c0, %c0_0] : memref<8x20xf32, #tpu.memory_space<vmem>>, vector<8x20xf32>
    %c0_1 = arith.constant 0 : index
    %c0_2 = arith.constant 0 : index
    %1 = vector.load %arg2[%c0_1, %c0_2] : memref<20x64xf32, #tpu.memory_space<vmem>>, vector<20x64xf32>
    %cst = arith.constant dense<0.000000e+00> : vector<8x64xf32>
    %2 = tpu.matmul %0, %1, %cst {dimension_numbers = #tpu.dot_dimension_numbers<[1], [0], [0], [1], [0, 0, 1, 1], [], []>} : vector<8x20xf32>, vector<20x64xf32>, vector<8x64xf32> -> vector<8x64xf32>
    %c0_3 = arith.constant 0 : index
    %c0_4 = arith.constant 0 : index
    %3 = vector.load %arg3[%c0_3, %c0_4] : memref<1x64xf32, #tpu.memory_space<vmem>>, vector<1x64xf32>
    %4 = vector.broadcast %3 : vector<1x64xf32> to vector<8x64xf32>
    %5 = arith.addf %2, %4 : vector<8x64xf32>
    %cst_5 = arith.constant 0.000000e+00 : f32
    %6 = vector.broadcast %cst_5 : f32 to vector<8x64xf32>
    %7 = arith.maximumf %5, %6 : vector<8x64xf32>
    %c0_6 = arith.constant 0 : index
    %c0_7 = arith.constant 0 : index
    %8 = vector.load %arg4[%c0_6, %c0_7] : memref<1x64xf32, #tpu.memory_space<vmem>>, vector<1x64xf32>
    %9 = vector.broadcast %8 : vector<1x64xf32> to vector<8x64xf32>
    %10 = arith.mulf %7, %9 : vector<8x64xf32>
    %cst_8 = arith.constant dense<0.000000e+00> : vector<8xf32>
    %11 = vector.multi_reduction <add>, %10, %cst_8 [1] : vector<8x64xf32> to vector<8xf32>
    %12 = vector.shape_cast %11 : vector<8xf32> to vector<8x1xf32>
    %c0_9 = arith.constant 0 : index
    %c0_10 = arith.constant 0 : index
    %13 = memref.load %arg5[%c0_9, %c0_10] : memref<1x1xf32, #tpu.memory_space<smem>>
    %14 = vector.broadcast %13 : f32 to vector<8x1xf32>
    %15 = arith.addf %12, %14 : vector<8x1xf32>
    %16 = arith.negf %15 : vector<8x1xf32>
    %17 = math.exp %16 : vector<8x1xf32>
    %cst_11 = arith.constant 1.000000e+00 : f32
    %18 = vector.broadcast %cst_11 : f32 to vector<8x1xf32>
    %19 = arith.addf %18, %17 : vector<8x1xf32>
    %20 = arith.divf %18, %19 : vector<8x1xf32>
    %c0_12 = arith.constant 0 : index
    %c0_13 = arith.constant 0 : index
    %21 = vector.load %arg6[%c0_12, %c0_13] : memref<8x1xf32, #tpu.memory_space<vmem>>, vector<8x1xf32>
    tpu.vector_store %arg6[%c0_12, %c0_13], %20 {strides = array<i32>} : memref<8x1xf32, #tpu.memory_space<vmem>>, vector<8x1xf32>,
    return
  }
  func.func @transform_0(%arg0: i32) -> (i32, i32) {
    %c0_i32 = arith.constant 0 : i32
    %c0_i32_0 = arith.constant 0 : i32
    return %arg0, %c0_i32 : i32, i32
  }
  func.func @transform_1(%arg0: i32) -> (i32, i32) {
    %c0_i32 = arith.constant 0 : i32
    %c0_i32_0 = arith.constant 0 : i32
    %c0_i32_1 = arith.constant 0 : i32
    return %c0_i32, %c0_i32_0 : i32, i32
  }
  func.func @transform_2(%arg0: i32) -> (i32, i32) {
    %c0_i32 = arith.constant 0 : i32
    %c0_i32_0 = arith.constant 0 : i32
    %c0_i32_1 = arith.constant 0 : i32
    return %c0_i32, %c0_i32_0 : i32, i32
  }
  func.func @transform_3(%arg0: i32) -> (i32, i32) {
    %c0_i32 = arith.constant 0 : i32
    %c0_i32_0 = arith.constant 0 : i32
    %c0_i32_1 = arith.constant 0 : i32
    return %c0_i32, %c0_i32_0 : i32, i32
  }
  func.func @transform_4(%arg0: i32) -> (i32, i32) {
    %c0_i32 = arith.constant 0 : i32
    %c0_i32_0 = arith.constant 0 : i32
    %c0_i32_1 = arith.constant 0 : i32
    return %c0_i32, %c0_i32_0 : i32, i32
  }
  func.func @transform_5(%arg0: i32) -> (i32, i32) {
    %c0_i32 = arith.constant 0 : i32
    %c0_i32_0 = arith.constant 0 : i32
    return %arg0, %c0_i32 : i32, i32
  }
}

</mosaic_0001>

<llo_original>
// kernel: tpu_custom_call.1
$region0: #{tpu_custom_call.1}
  #allocation0 [shape = 'u32[]', space=smem, size = 0x4, offset = 0x4, fixed_abs, tag = 'smem constant byte address 0x4 - core index']
  #allocation1 [shape = 'u32[144,128]{1,0:T(1,128)}', space=vmem, size = 0x12000, scoped, tag = 'internal scratch']
  #allocation2 [shape = 'f32[1,1]{1,0:T(1,128)S(6)}', space=smem, size = 0x200, scoped, tag = 'scoped memory for tpu_custom_call.1']
  %s0 = inlined_call_operand.hbm [shape: f32[8,20], index: 0, kind: input, shape index: {}]
  %s1 = inlined_call_operand.hbm [shape: f32[20,64], index: 1, kind: input, shape index: {}]
  %s2 = inlined_call_operand.vmem [shape: f32[1,64], index: 2, kind: input, shape index: {}]
  %s3 = inlined_call_operand.vmem [shape: f32[1,64], index: 3, kind: input, shape index: {}]
  %s4 = inlined_call_operand.<no memory space> [shape: f32[1,1], index: 4, kind: input, shape index: {}]
  %s5 = inlined_call_operand.vmem [shape: f32[8,1], index: 5, kind: output, shape index: {}]
  %s6 = sld [smem:[#allocation0]]
  $region38: #{tpu_custom_call.1} parent=0
    _
  %s8 = ssub.s32 1, %s6
  %s9 = scalar_select 0, %s8, %s6
  %10 = sst [smem:[#allocation2]] %s4
  $region1: #{tpu_custom_call.1} parent=0
    #allocation3 [shape = 'u8[4096]{0}', space=vmem, size = 0x1000, scoped, tag = 'input window, operand 0, single buffered']
    #allocation4 [shape = 's32[1]{0}', space=sflag, size = 0x4, scoped, tag = 'scoped memory for tpu_custom_call.1']
    #allocation5 [shape = 'u8[12288]{0}', space=vmem, size = 0x3000, scoped, tag = 'input window, operand 1, single buffered']
    #allocation6 [shape = 's32[1]{0}', space=sflag, size = 0x4, scoped, tag = 'scoped memory for tpu_custom_call.1']
    %11 = vsyncpa [#allocation4], 0
    %12 = vsyncpa [#allocation6], 0
    // Predicated region
    $region2: #{tpu_custom_call.1} parent=1 // pred_check
      _
    $region3: #{tpu_custom_call.1} parent=1 // pred_check_branch
      %14 = sbr.rel (0) target = $region5
    $region4: #{tpu_custom_call.1} parent=1 // pred_region
      %s16 = ssub.s32 128, 128
      %17 = vsyncadd [#allocation4], %s16
      %s19 = sshll.u32 [#allocation3], 4
      %s20 = int_to_ptr.vmem [resolvable:$true] %s19
      %22 = dma.hbm_to_vmem [thread:$0]  %s0, 128, %s20, [#allocation4]
    $region5: #{tpu_custom_call.1} parent=1 // pred_fallthru
      _
    // Predicated region
    $region6: #{tpu_custom_call.1} parent=1 // pred_check
      _
    $region7: #{tpu_custom_call.1} parent=1 // pred_check_branch
      %24 = sbr.rel (0) target = $region9
    $region8: #{tpu_custom_call.1} parent=1 // pred_region
      %s26 = ssub.s32 384, 384
      %27 = vsyncadd [#allocation6], %s26
      %s28 = sshll.u32 [#allocation5], 4
      %s29 = int_to_ptr.vmem [resolvable:$true] %s28
      %34 = dma.hbm_to_vmem [thread:$0]  %s1, 384, %s29, [#allocation6], 128, 128, 8
    $region9: #{tpu_custom_call.1} parent=1 // pred_fallthru
      _
    // Predicated region
    $region10: #{tpu_custom_call.1} parent=1 // pred_check
      _
    $region11: #{tpu_custom_call.1} parent=1 // pred_check_branch
      %36 = sbr.rel (0) target = $region13
    $region12: #{tpu_custom_call.1} parent=1 // pred_region
      _
    $region13: #{tpu_custom_call.1} parent=1 // pred_fallthru
      _
    // Predicated region
    $region14: #{tpu_custom_call.1} parent=1 // pred_check
      _
    $region15: #{tpu_custom_call.1} parent=1 // pred_check_branch
      %38 = sbr.rel (0) target = $region17
    $region16: #{tpu_custom_call.1} parent=1 // pred_region
      _
    $region17: #{tpu_custom_call.1} parent=1 // pred_fallthru
      _
    // Predicated region
    $region18: #{tpu_custom_call.1} parent=1 // pred_check
      _
    $region19: #{tpu_custom_call.1} parent=1 // pred_check_branch
      %40 = sbr.rel (0) target = $region21
    $region20: #{tpu_custom_call.1} parent=1 // pred_region
      _
    $region21: #{tpu_custom_call.1} parent=1 // pred_fallthru
      _
    // Predicated region
    $region22: #{tpu_custom_call.1} parent=1 // pred_check
      _
    $region23: #{tpu_custom_call.1} parent=1 // pred_check_branch
      %42 = sbr.rel (0) target = $region25
    $region24: #{tpu_custom_call.1} parent=1 // pred_region
      %43 = dma.done [#allocation4], 128
    $region25: #{tpu_custom_call.1} parent=1 // pred_fallthru
      _
    // Predicated region
    $region26: #{tpu_custom_call.1} parent=1 // pred_check
      _
    $region27: #{tpu_custom_call.1} parent=1 // pred_check_branch
      %45 = sbr.rel (0) target = $region29
    $region28: #{tpu_custom_call.1} parent=1 // pred_region
      %46 = dma.done [#allocation6], 384
    $region29: #{tpu_custom_call.1} parent=1 // pred_fallthru
      _
    %v47 = vld [vmem:[#allocation3] sm:$0xff]
    %v48 = vld [vmem:[#allocation5] sm:$0xff]
    %v49 = vld [vmem:[#allocation5 + $0x8] sm:$0xff]
    %v50 = vld [vmem:[#allocation5 + $0x10] sm:$0xf]
    %v51 = vld [vmem:[%s2] sm:$0x1]
    %v53 = vlaneseq
    %v54 = vshrl.u32 %v53, 7
    %v55 = vsub.s32 0, %v54
    %v56 = vrot.slane %v51, %v55
    %vm58 = vcmask 162816
    %v60 = vsel %vm58, %v47, 0
    %vm62 = vcmask 1043456
    %v64 = vsel %vm62, %v50, 0
    %66 = vmatprep.subr.mxu0 0.0
    %67 = vmatpush1.msra.mxu0 0.0
    %68 = vmatprep.subr.mxu0 0.0
    %69 = vmatpush1.msra.mxu0 0.0
    %70 = vmatprep.subr.mxu0 0.0
    %71 = vmatpush1.msra.mxu0 0.0
    %72 = vmatprep.subr.mxu0 0.0
    %73 = vmatpush1.msra.mxu0 0.0
    %74 = vmatprep.subr.mxu0 0.0
    %75 = vmatpush1.msra.mxu0 0.0
    %76 = vmatprep.subr.mxu0 0.0
    %77 = vmatpush1.msra.mxu0 0.0
    %78 = vmatprep.subr.mxu0 0.0
    %79 = vmatpush1.msra.mxu0 0.0
    %80 = vmatprep.subr.mxu0 0.0
    %81 = vmatpush1.msra.mxu0 0.0
    %82 = vmatprep.subr.mxu0 0.0
    %83 = vmatpush1.msra.mxu0 0.0
    %84 = vmatprep.subr.mxu0 0.0
    %85 = vmatpush1.msra.mxu0 0.0
    %86 = vmatprep.subr.mxu0 0.0
    %87 = vmatpush1.msra.mxu0 0.0
    %88 = vmatprep.subr.mxu0 0.0
    %89 = vmatpush1.msra.mxu0 0.0
    %90 = vmatprep.subr.mxu0 0.0
    %91 = vmatpush1.msra.mxu0 0.0
    %92 = vmatprep.subr.mxu0 0.0
    %93 = vmatpush1.msra.mxu0 %v64
    %94 = vmatprep.subr.mxu0 0.0
    %95 = vmatpush1.msra.mxu0 %v49
    %96 = vmatprep.subr.mxu0 0.0
    %97 = vmatpush1.msra.mxu0 %v48
    %98 = vmatprep.subr.mxu0 0.0
    %99 = vmatpush2.msra.mxu0 0.0
    %100 = vmatprep.subr.mxu0 0.0
    %101 = vmatpush2.msra.mxu0 0.0
    %102 = vmatprep.subr.mxu0 0.0
    %103 = vmatpush2.msra.mxu0 0.0
    %104 = vmatprep.subr.mxu0 0.0
    %105 = vmatpush2.msra.mxu0 0.0
    %106 = vmatprep.subr.mxu0 0.0
    %107 = vmatpush2.msra.mxu0 0.0
    %108 = vmatprep.subr.mxu0 0.0
    %109 = vmatpush2.msra.mxu0 0.0
    %110 = vmatprep.subr.mxu0 0.0
    %111 = vmatpush2.msra.mxu0 0.0
    %112 = vmatprep.subr.mxu0 0.0
    %113 = vmatpush2.msra.mxu0 0.0
    %114 = vmatprep.subr.mxu0 0.0
    %115 = vmatpush2.msra.mxu0 0.0
    %116 = vmatprep.subr.mxu0 0.0
    %117 = vmatpush2.msra.mxu0 0.0
    %118 = vmatprep.subr.mxu0 0.0
    %119 = vmatpush2.msra.mxu0 0.0
    %120 = vmatprep.subr.mxu0 0.0
    %121 = vmatpush2.msra.mxu0 0.0
    %122 = vmatprep.subr.mxu0 0.0
    %123 = vmatpush2.msra.mxu0 0.0
    %124 = vmatprep.subr.mxu0 0.0
    %125 = vmatpush2.msra.mxu0 0.0
    %126 = vmatprep.subr.mxu0 0.0
    %127 = vmatpush2.msra.mxu0 0.0
    %128 = vmatprep.subr.mxu0 0.0
    %129 = vmatpush2.msra.mxu0 0.0
    %130 = vmatprep.mubr.f32.mxu0 0.0
    %131 = vmatmul.mubr.f32.gmra.mxu0 %v60
    %v132 = vpop.f32.mrf.mxu0
    %v133 = vadd.f32 %v56, %v132
    %v134 = vpop.f32.mrf.mxu0
    %135 = vdwg.mxu0
    %v136 = vmax.f32 %v133, 0.0
    %v137 = vld [vmem:[%s3] sm:$0x1]
    %v139 = vlaneseq
    %v140 = vshrl.u32 %v139, 7
    %v141 = vsub.s32 0, %v140
    %v142 = vrot.slane %v137, %v141
    %v144 = vmul.f32 %v136, %v142
    %vm145 = vcmask 523264
    %v146 = vsel %vm145, %v144, 0.0
    %147 = vadd.xlane.f32.xlu0 %v146
    %v148 = vpop.xlane.xlu0 %147
    %s149 = sld [smem:[#allocation2]]
    %v150 = vstv %s149
    %v151 = vadd.f32 %v148, %v150
    %v152 = vxor.u32 %v151, 2147483648
    %v153 = vmul.f32 %v152, 1.442695
    %v154 = vpow.pop %v153
    %v155 = vadd.f32 %v154, 1.0
    %v156 = vrcp.pop %v155
    %v157 = vmul.f32 1.0, %v156
    %vm158 = vcmask 7168
    %159 = vst.msk [vmem:[%s5] sm:$0xff] %vm158, %v157
    // Predicated region
    $region30: #{tpu_custom_call.1} parent=1 // pred_check
      _
    $region31: #{tpu_custom_call.1} parent=1 // pred_check_branch
      %161 = sbr.rel (0) target = $region33
    $region32: #{tpu_custom_call.1} parent=1 // pred_region
      _
    $region33: #{tpu_custom_call.1} parent=1 // pred_fallthru
      _
    // Predicated region
    $region34: #{tpu_custom_call.1} parent=1 // pred_check
      _
    $region35: #{tpu_custom_call.1} parent=1 // pred_check_branch
      %163 = sbr.rel (0) target = $region37
    $region36: #{tpu_custom_call.1} parent=1 // pred_region
      _
    $region37: #{tpu_custom_call.1} parent=1 // pred_fallthru
      _
    %164 = vsyncpa [#allocation4], 1
    %165 = vsyncpa [#allocation6], 1

</llo_original>
